<compile_context>
chip_gen: v7x
topology: tpu7x:2x2x1
jax: 0.10.0
libtpu: 0.0.40
codegen_flags: <defaults>
</compile_context>

<pallas_src>
import functools

import jax
import jax.numpy as jnp
from jax.experimental import pallas as pl
from jax.experimental.pallas import tpu as pltpu


def _mae_decoder_kernel(x_ref, w1_ref, b1_ref, w2_ref, b2_ref, o_ref):
    # x_ref : (TM, E)   w1_ref: (E, H)    b1_ref: (1, H)
    # w2_ref: (H, Pp)   b2_ref: (1, Pp)   o_ref : (TM, Pp)
    x = x_ref[...]
    h = jnp.dot(x, w1_ref[...], preferred_element_type=jnp.float32)
    h = jnp.maximum(h + b1_ref[...], 0.0)          # bias + ReLU on the VPU (f32)
    out = jnp.dot(h.astype(w2_ref.dtype), w2_ref[...],
                  preferred_element_type=jnp.float32)
    o_ref[...] = (out + b2_ref[...]).astype(o_ref.dtype)


def _round_up(n, m):
    return ((n + m - 1) // m) * m


def _choose_tm(M):
    # 256 rows per tile at production sizes; smaller M just rounds up to the
    # f32 sublane multiple (8) so the block shape stays legal.
    if M >= 256:
        return 256
    return _round_up(M, 8)


@functools.partial(jax.jit, static_argnames=("compute_dtype",))
def mae_decoder(x, w1, b1, w2, b2, compute_dtype=None):
    """x: (B, S, E) -> (B, S, P).  Weights stored as (in, out) = PyTorch W.T."""
    B, S, E = x.shape
    H = w1.shape[1]
    P = w2.shape[1]
    M = B * S

    out_dtype = x.dtype
    cdt = out_dtype if compute_dtype is None else compute_dtype

    TM = _choose_tm(M)
    M_pad = _round_up(M, TM)
    P_pad = _round_up(P, 128)          # lane-dense output stores

    x2d = x.reshape(M, E).astype(cdt)
    if M_pad != M:
        x2d = jnp.pad(x2d, ((0, M_pad - M), (0, 0)))

    w1c = w1.astype(cdt)
    b1_2d = b1.reshape(1, H).astype(jnp.float32)
    w2c = w2.astype(cdt)
    b2_2d = b2.reshape(1, P).astype(jnp.float32)
    if P_pad != P:
        w2c = jnp.pad(w2c, ((0, 0), (0, P_pad - P)))
        b2_2d = jnp.pad(b2_2d, ((0, 0), (0, P_pad - P)))

    # VMEM budget: double-buffered x/out tiles + (conservatively double-
    # buffered) resident weights + the f32 hidden tile, with slack.
    isz = jnp.dtype(cdt).itemsize
    tile_bytes = 2 * (TM * E + TM * P_pad) * isz
    weight_bytes = 2 * ((E * H + H * P_pad) * isz + (H + P_pad) * 4)
    hidden_bytes = TM * H * 4
    vmem_limit = max(32 * 1024 * 1024,
                     int(1.25 * (tile_bytes + weight_bytes + hidden_bytes))
                     + (1 << 20))

    grid = (M_pad // TM,)

    out2d = pl.pallas_call(
        _mae_decoder_kernel,
        out_shape=jax.ShapeDtypeStruct((M_pad, P_pad), out_dtype),
        grid_spec=pl.GridSpec(
            grid=grid,
            in_specs=[
                pl.BlockSpec((TM, E), lambda i: (i, 0)),     # streamed row tile
                pl.BlockSpec((E, H), lambda i: (0, 0)),      # resident weights
                pl.BlockSpec((1, H), lambda i: (0, 0)),
                pl.BlockSpec((H, P_pad), lambda i: (0, 0)),
                pl.BlockSpec((1, P_pad), lambda i: (0, 0)),
            ],
            out_specs=pl.BlockSpec((TM, P_pad), lambda i: (i, 0)),
        ),
        compiler_params=pltpu.CompilerParams(
            dimension_semantics=("parallel",),   # row tiles are independent
            vmem_limit_bytes=vmem_limit,
        ),
    )(x2d, w1c, b1_2d, w2c, b2_2d)

    out2d = out2d[:M, :P]
    return out2d.reshape(B, S, P)


def init_params(key, emb_dim, hidden_dim, patch_dim, dtype=jnp.float32):
    """Deterministic init mimicking nn.Linear default (uniform +-1/sqrt(fan_in))."""
    k1, k2, k3, k4 = jax.random.split(key, 4)
    lim1 = 1.0 / (emb_dim ** 0.5)
    lim2 = 1.0 / (hidden_dim ** 0.5)
    w1 = jax.random.uniform(k1, (emb_dim, hidden_dim), dtype, -lim1, lim1)
    b1 = jax.random.uniform(k2, (hidden_dim,), dtype, -lim1, lim1)
    w2 = jax.random.uniform(k3, (hidden_dim, patch_dim), dtype, -lim2, lim2)
    b2 = jax.random.uniform(k4, (patch_dim,), dtype, -lim2, lim2)
    return w1, b1, w2, b2


if __name__ == "__main__":
    # Small shapes consistent with the module: (batch, tokens, emb_dim).
    B, S = 2, 8
    EMB_DIM, HIDDEN_DIM, PATCH_DIM = 32, 64, 128

    key = jax.random.PRNGKey(0)
    kx, kp = jax.random.split(key)
    x = jax.random.normal(kx, (B, S, EMB_DIM), dtype=jnp.float32)
    w1, b1, w2, b2 = init_params(kp, EMB_DIM, HIDDEN_DIM, PATCH_DIM)

    out = mae_decoder(x, w1, b1, w2, b2)
    out = jax.block_until_ready(out)

    # Reference check against plain-JAX MLP.
    ref = jnp.maximum(x.reshape(-1, EMB_DIM) @ w1 + b1, 0.0) @ w2 + b2
    ref = ref.reshape(B, S, PATCH_DIM)
    assert out.shape == (B, S, PATCH_DIM)
    assert jnp.allclose(out, ref, atol=1e-4, rtol=1e-4)

    print("KERNEL_OK")
</pallas_src>

<mosaic_0001>
module attributes {stable_mosaic.version = 11 : i64} {
  func.func @_mae_decoder_kernel(%arg0: i32, %arg1: memref<16x32xf32, #tpu.memory_space<vmem>>, %arg2: memref<32x64xf32, #tpu.memory_space<vmem>>, %arg3: memref<1x64xf32, #tpu.memory_space<vmem>>, %arg4: memref<64x128xf32, #tpu.memory_space<vmem>>, %arg5: memref<1x128xf32, #tpu.memory_space<vmem>>, %arg6: memref<16x128xf32, #tpu.memory_space<vmem>>) attributes {dimension_semantics = [#tpu.dimension_semantics<parallel>], iteration_bounds = array<i64: 1>, scalar_prefetch = 0 : i64, scratch_operands = 0 : i64, tpu.core_type = #tpu.core_type<tc>, window_params = [{transform_indices = @transform_0, window_bounds = array<i64: 16, 32>}, {pipeline_mode = #tpu.pipeline_mode<synchronous>, transform_indices = @transform_1, window_bounds = array<i64: 32, 64>}, {pipeline_mode = #tpu.pipeline_mode<synchronous>, transform_indices = @transform_2, window_bounds = array<i64: 1, 64>}, {pipeline_mode = #tpu.pipeline_mode<synchronous>, transform_indices = @transform_3, window_bounds = array<i64: 64, 128>}, {pipeline_mode = #tpu.pipeline_mode<synchronous>, transform_indices = @transform_4, window_bounds = array<i64: 1, 128>}, {transform_indices = @transform_5, window_bounds = array<i64: 16, 128>}]} {
    %c0 = arith.constant 0 : index
    %c0_0 = arith.constant 0 : index
    %0 = vector.load %arg1[%c0, %c0_0] : memref<16x32xf32, #tpu.memory_space<vmem>>, vector<16x32xf32>
    %c0_1 = arith.constant 0 : index
    %c0_2 = arith.constant 0 : index
    %1 = vector.load %arg2[%c0_1, %c0_2] : memref<32x64xf32, #tpu.memory_space<vmem>>, vector<32x64xf32>
    %cst = arith.constant dense<0.000000e+00> : vector<16x64xf32>
    %2 = tpu.matmul %0, %1, %cst {dimension_numbers = #tpu.dot_dimension_numbers<[1], [0], [0], [1], [0, 0, 1, 1], [], []>} : vector<16x32xf32>, vector<32x64xf32>, vector<16x64xf32> -> vector<16x64xf32>
    %c0_3 = arith.constant 0 : index
    %c0_4 = arith.constant 0 : index
    %3 = vector.load %arg3[%c0_3, %c0_4] : memref<1x64xf32, #tpu.memory_space<vmem>>, vector<1x64xf32>
    %4 = vector.broadcast %3 : vector<1x64xf32> to vector<16x64xf32>
    %5 = arith.addf %2, %4 : vector<16x64xf32>
    %cst_5 = arith.constant 0.000000e+00 : f32
    %6 = vector.broadcast %cst_5 : f32 to vector<16x64xf32>
    %7 = arith.maximumf %5, %6 : vector<16x64xf32>
    %c0_6 = arith.constant 0 : index
    %c0_7 = arith.constant 0 : index
    %8 = vector.load %arg4[%c0_6, %c0_7] : memref<64x128xf32, #tpu.memory_space<vmem>>, vector<64x128xf32>
    %cst_8 = arith.constant dense<0.000000e+00> : vector<16x128xf32>
    %9 = tpu.matmul %7, %8, %cst_8 {dimension_numbers = #tpu.dot_dimension_numbers<[1], [0], [0], [1], [0, 0, 1, 1], [], []>} : vector<16x64xf32>, vector<64x128xf32>, vector<16x128xf32> -> vector<16x128xf32>
    %c0_9 = arith.constant 0 : index
    %c0_10 = arith.constant 0 : index
    %10 = vector.load %arg5[%c0_9, %c0_10] : memref<1x128xf32, #tpu.memory_space<vmem>>, vector<1x128xf32>
    %11 = vector.broadcast %10 : vector<1x128xf32> to vector<16x128xf32>
    %12 = arith.addf %9, %11 : vector<16x128xf32>
    %c0_11 = arith.constant 0 : index
    %c0_12 = arith.constant 0 : index
    %13 = vector.load %arg6[%c0_11, %c0_12] : memref<16x128xf32, #tpu.memory_space<vmem>>, vector<16x128xf32>
    tpu.vector_store %arg6[%c0_11, %c0_12], %12 {strides = array<i32>} : memref<16x128xf32, #tpu.memory_space<vmem>>, vector<16x128xf32>,
    return
  }
  func.func @transform_0(%arg0: i32) -> (i32, i32) {
    %c0_i32 = arith.constant 0 : i32
    %c0_i32_0 = arith.constant 0 : i32
    return %arg0, %c0_i32 : i32, i32
  }
  func.func @transform_1(%arg0: i32) -> (i32, i32) {
    %c0_i32 = arith.constant 0 : i32
    %c0_i32_0 = arith.constant 0 : i32
    %c0_i32_1 = arith.constant 0 : i32
    return %c0_i32, %c0_i32_0 : i32, i32
  }
  func.func @transform_2(%arg0: i32) -> (i32, i32) {
    %c0_i32 = arith.constant 0 : i32
    %c0_i32_0 = arith.constant 0 : i32
    %c0_i32_1 = arith.constant 0 : i32
    return %c0_i32, %c0_i32_0 : i32, i32
  }
  func.func @transform_3(%arg0: i32) -> (i32, i32) {
    %c0_i32 = arith.constant 0 : i32
    %c0_i32_0 = arith.constant 0 : i32
    %c0_i32_1 = arith.constant 0 : i32
    return %c0_i32, %c0_i32_0 : i32, i32
  }
  func.func @transform_4(%arg0: i32) -> (i32, i32) {
    %c0_i32 = arith.constant 0 : i32
    %c0_i32_0 = arith.constant 0 : i32
    %c0_i32_1 = arith.constant 0 : i32
    return %c0_i32, %c0_i32_0 : i32, i32
  }
  func.func @transform_5(%arg0: i32) -> (i32, i32) {
    %c0_i32 = arith.constant 0 : i32
    %c0_i32_0 = arith.constant 0 : i32
    return %arg0, %c0_i32 : i32, i32
  }
}

</mosaic_0001>

<llo_original>
// kernel: mae_decoder.1
$region0: #{mae_decoder.1}
  #allocation0 [shape = 'u32[]', space=smem, size = 0x4, offset = 0x4, fixed_abs, tag = 'smem constant byte address 0x4 - core index']
  #allocation1 [shape = 'u32[144,128]{1,0:T(1,128)}', space=vmem, size = 0x12000, scoped, tag = 'internal scratch']
  %s0 = inlined_call_operand.hbm [shape: f32[16,32], index: 0, kind: input, shape index: {}]
  %s1 = inlined_call_operand.hbm [shape: f32[32,64], index: 1, kind: input, shape index: {}]
  %s2 = inlined_call_operand.vmem [shape: f32[1,64], index: 2, kind: input, shape index: {}]
  %s3 = inlined_call_operand.hbm [shape: f32[64,128], index: 3, kind: input, shape index: {}]
  %s4 = inlined_call_operand.vmem [shape: f32[1,128], index: 4, kind: input, shape index: {}]
  %s5 = inlined_call_operand.hbm [shape: f32[16,128], index: 5, kind: output, shape index: {}]
  %s6 = sld [smem:[#allocation0]]
  $region42: #{mae_decoder.1} parent=0
    _
  %s8 = ssub.s32 1, %s6
  %s9 = scalar_select 0, %s8, %s6
  $region1: #{mae_decoder.1} parent=0
    #allocation2 [shape = 'u8[8192]{0}', space=vmem, size = 0x2000, scoped, tag = 'input window, operand 0, single buffered']
    #allocation3 [shape = 's32[1]{0}', space=sflag, size = 0x4, scoped, tag = 'scoped memory for mae_decoder.1']
    #allocation4 [shape = 's32[1]{0}', space=sflag, size = 0x4, scoped, tag = 'scoped memory for mae_decoder.1']
    #allocation5 [shape = 'u8[16384]{0}', space=vmem, size = 0x4000, scoped, tag = 'input window, operand 1, single buffered']
    #allocation6 [shape = 's32[1]{0}', space=sflag, size = 0x4, scoped, tag = 'scoped memory for mae_decoder.1']
    #allocation7 [shape = 'u8[32768]{0}', space=vmem, size = 0x8000, scoped, tag = 'input window, operand 3, single buffered']
    #allocation8 [shape = 'u8[8192]{0}', space=vmem, size = 0x2000, scoped, tag = 'output window, operand 0, single buffered']
    %10 = vsyncpa [#allocation3], 0
    %11 = vsyncpa [#allocation6], 0
    %12 = vsyncpa [#allocation4], 0
    // Predicated region
    $region2: #{mae_decoder.1} parent=1 // pred_check
      _
    $region3: #{mae_decoder.1} parent=1 // pred_check_branch
      %14 = sbr.rel (0) target = $region5
    $region4: #{mae_decoder.1} parent=1 // pred_region
      %s16 = ssub.s32 256, 256
      %17 = vsyncadd [#allocation3], %s16
      %s18 = sshll.u32 [#allocation2], 4
      %s19 = int_to_ptr.vmem [resolvable:$true] %s18
      %24 = dma.hbm_to_vmem [thread:$0]  %s0, 256, %s19, [#allocation3], 128, 128, 8
    $region5: #{mae_decoder.1} parent=1 // pred_fallthru
      _
    // Predicated region
    $region6: #{mae_decoder.1} parent=1 // pred_check
      _
    $region7: #{mae_decoder.1} parent=1 // pred_check_branch
      %26 = sbr.rel (0) target = $region9
    $region8: #{mae_decoder.1} parent=1 // pred_region
      %s28 = ssub.s32 512, 512
      %29 = vsyncadd [#allocation6], %s28
      %s30 = sshll.u32 [#allocation5], 4
      %s31 = int_to_ptr.vmem [resolvable:$true] %s30
      %36 = dma.hbm_to_vmem [thread:$0]  %s1, 512, %s31, [#allocation6], 128, 128, 8
    $region9: #{mae_decoder.1} parent=1 // pred_fallthru
      _
    // Predicated region
    $region10: #{mae_decoder.1} parent=1 // pred_check
      _
    $region11: #{mae_decoder.1} parent=1 // pred_check_branch
      %38 = sbr.rel (0) target = $region13
    $region12: #{mae_decoder.1} parent=1 // pred_region
      _
    $region13: #{mae_decoder.1} parent=1 // pred_fallthru
      _
    // Predicated region
    $region14: #{mae_decoder.1} parent=1 // pred_check
      _
    $region15: #{mae_decoder.1} parent=1 // pred_check_branch
      %40 = sbr.rel (0) target = $region17
    $region16: #{mae_decoder.1} parent=1 // pred_region
      %s42 = ssub.s32 1024, 1024
      %43 = vsyncadd [#allocation6], %s42
      %s44 = sshll.u32 [#allocation7], 4
      %s45 = int_to_ptr.vmem [resolvable:$true] %s44
      %50 = dma.hbm_to_vmem [thread:$0]  %s3, 1024, %s45, [#allocation6], 128, 128, 8
    $region17: #{mae_decoder.1} parent=1 // pred_fallthru
      _
    // Predicated region
    $region18: #{mae_decoder.1} parent=1 // pred_check
      _
    $region19: #{mae_decoder.1} parent=1 // pred_check_branch
      %52 = sbr.rel (0) target = $region21
    $region20: #{mae_decoder.1} parent=1 // pred_region
      _
    $region21: #{mae_decoder.1} parent=1 // pred_fallthru
      _
    // Predicated region
    $region22: #{mae_decoder.1} parent=1 // pred_check
      _
    $region23: #{mae_decoder.1} parent=1 // pred_check_branch
      %54 = sbr.rel (0) target = $region25
    $region24: #{mae_decoder.1} parent=1 // pred_region
      %55 = dma.done [#allocation3], 256
    $region25: #{mae_decoder.1} parent=1 // pred_fallthru
      _
    // Predicated region
    $region26: #{mae_decoder.1} parent=1 // pred_check
      _
    $region27: #{mae_decoder.1} parent=1 // pred_check_branch
      %57 = sbr.rel (0) target = $region29
    $region28: #{mae_decoder.1} parent=1 // pred_region
      %58 = dma.done [#allocation6], 512
    $region29: #{mae_decoder.1} parent=1 // pred_fallthru
      _
    // Predicated region
    $region30: #{mae_decoder.1} parent=1 // pred_check
      _
    $region31: #{mae_decoder.1} parent=1 // pred_check_branch
      %60 = sbr.rel (0) target = $region33
    $region32: #{mae_decoder.1} parent=1 // pred_region
      %61 = dma.done [#allocation6], 1024
    $region33: #{mae_decoder.1} parent=1 // pred_fallthru
      _
    %v62 = vld [vmem:[#allocation2] sm:$0xff]
    %v63 = vld [vmem:[#allocation2 + $0x8] sm:$0xff]
    %v64 = vld [vmem:[#allocation5] sm:$0xff]
    %v65 = vld [vmem:[#allocation5 + $0x8] sm:$0xff]
    %v66 = vld [vmem:[#allocation5 + $0x10] sm:$0xff]
    %v67 = vld [vmem:[#allocation5 + $0x18] sm:$0xff]
    %v68 = vld [vmem:[%s2] sm:$0x1]
    %v70 = vlaneseq
    %v71 = vshrl.u32 %v70, 7
    %v72 = vsub.s32 0, %v71
    %v73 = vrot.slane %v68, %v72
    %vm75 = vcmask 261120
    %v77 = vsel %vm75, %v62, 0
    %v80 = vsel %vm75, %v63, 0
    %82 = vmatprep.subr.mxu0 0.0
    %83 = vmatpush1.msra.mxu0 %v64
    %84 = vmatprep.subr.mxu0 0.0
    %85 = vmatpush1.msra.mxu0 %v65
    %86 = vmatprep.subr.mxu0 0.0
    %87 = vmatpush1.msra.mxu0 %v66
    %88 = vmatprep.subr.mxu0 0.0
    %89 = vmatpush1.msra.mxu0 %v67
    %90 = vmatprep.subr.mxu0 0.0
    %91 = vmatpush1.msra.mxu0 0.0
    %92 = vmatprep.subr.mxu0 0.0
    %93 = vmatpush1.msra.mxu0 0.0
    %94 = vmatprep.subr.mxu0 0.0
    %95 = vmatpush1.msra.mxu0 0.0
    %96 = vmatprep.subr.mxu0 0.0
    %97 = vmatpush1.msra.mxu0 0.0
    %98 = vmatprep.subr.mxu0 0.0
    %99 = vmatpush1.msra.mxu0 0.0
    %100 = vmatprep.subr.mxu0 0.0
    %101 = vmatpush1.msra.mxu0 0.0
    %102 = vmatprep.subr.mxu0 0.0
    %103 = vmatpush1.msra.mxu0 0.0
    %104 = vmatprep.subr.mxu0 0.0
    %105 = vmatpush1.msra.mxu0 0.0
    %106 = vmatprep.subr.mxu0 0.0
    %107 = vmatpush1.msra.mxu0 0.0
    %108 = vmatprep.subr.mxu0 0.0
    %109 = vmatpush1.msra.mxu0 0.0
    %110 = vmatprep.subr.mxu0 0.0
    %111 = vmatpush1.msra.mxu0 0.0
    %112 = vmatprep.subr.mxu0 0.0
    %113 = vmatpush1.msra.mxu0 0.0
    %114 = vmatprep.subr.mxu0 0.0
    %115 = vmatpush1.msra.mxu0 0.0
    %116 = vmatprep.subr.mxu0 0.0
    %117 = vmatpush1.msra.mxu0 0.0
    %118 = vmatprep.subr.mxu0 0.0
    %119 = vmatpush1.msra.mxu0 0.0
    %120 = vmatprep.subr.mxu0 0.0
    %121 = vmatpush1.msra.mxu0 0.0
    %122 = vmatprep.subr.mxu0 0.0
    %123 = vmatpush1.msra.mxu0 0.0
    %124 = vmatprep.subr.mxu0 0.0
    %125 = vmatpush1.msra.mxu0 0.0
    %126 = vmatprep.subr.mxu0 0.0
    %127 = vmatpush1.msra.mxu0 0.0
    %128 = vmatprep.subr.mxu0 0.0
    %129 = vmatpush1.msra.mxu0 0.0
    %130 = vmatprep.subr.mxu0 0.0
    %131 = vmatpush1.msra.mxu0 0.0
    %132 = vmatprep.subr.mxu0 0.0
    %133 = vmatpush1.msra.mxu0 0.0
    %134 = vmatprep.subr.mxu0 0.0
    %135 = vmatpush1.msra.mxu0 0.0
    %136 = vmatprep.subr.mxu0 0.0
    %137 = vmatpush1.msra.mxu0 0.0
    %138 = vmatprep.subr.mxu0 0.0
    %139 = vmatpush1.msra.mxu0 0.0
    %140 = vmatprep.subr.mxu0 0.0
    %141 = vmatpush1.msra.mxu0 0.0
    %142 = vmatprep.subr.mxu0 0.0
    %143 = vmatpush1.msra.mxu0 0.0
    %144 = vmatprep.subr.mxu0 0.0
    %145 = vmatpush1.msra.mxu0 0.0
    %146 = vmatprep.mubr.f32.mxu0 0.0
    %147 = vmatmul.mubr.f32.gmra.mrb[0].mxu0 %v77
    %v148 = vpop.f32.mrb[0].mxu0
    %v149 = vadd.f32 %v73, %v148
    %v150 = vpop.f32.mrb[0].mxu0
    %151 = vmatprep.mubr.f32.mxu0 0.0
    %152 = vmatmul.mubr.f32.gmra.mrb[0].mxu0 %v80
    %v153 = vpop.f32.mrb[0].mxu0
    %v154 = vadd.f32 %v73, %v153
    %v155 = vpop.f32.mrb[0].mxu0
    %156 = vdwg.mxu0
    %v157 = vmax.f32 %v149, 0.0
    %v158 = vmax.f32 %v154, 0.0
    %v159 = vld [vmem:[#allocation7] sm:$0xff]
    %v160 = vld [vmem:[#allocation7 + $0x8] sm:$0xff]
    %v161 = vld [vmem:[#allocation7 + $0x10] sm:$0xff]
    %v162 = vld [vmem:[#allocation7 + $0x18] sm:$0xff]
    %v163 = vld [vmem:[#allocation7 + $0x20] sm:$0xff]
    %v164 = vld [vmem:[#allocation7 + $0x28] sm:$0xff]
    %v165 = vld [vmem:[#allocation7 + $0x30] sm:$0xff]
    %v166 = vld [vmem:[#allocation7 + $0x38] sm:$0xff]
    %v167 = vld [vmem:[%s4] sm:$0x1]
    %v169 = vlaneseq
    %v170 = vshrl.u32 %v169, 7
    %v171 = vsub.s32 0, %v170
    %v172 = vrot.slane %v167, %v171
    %vm174 = vcmask 523264
    %v176 = vsel %vm174, %v157, 0
    %v179 = vsel %vm174, %v158, 0
    %181 = vmatprep.subr.mxu0 0.0
    %182 = vmatpush1.msra.mxu0 %v159
    %183 = vmatprep.subr.mxu0 0.0
    %184 = vmatpush1.msra.mxu0 %v160
    %185 = vmatprep.subr.mxu0 0.0
    %186 = vmatpush1.msra.mxu0 %v161
    %187 = vmatprep.subr.mxu0 0.0
    %188 = vmatpush1.msra.mxu0 %v162
    %189 = vmatprep.subr.mxu0 0.0
    %190 = vmatpush1.msra.mxu0 %v163
    %191 = vmatprep.subr.mxu0 0.0
    %192 = vmatpush1.msra.mxu0 %v164
    %193 = vmatprep.subr.mxu0 0.0
    %194 = vmatpush1.msra.mxu0 %v165
    %195 = vmatprep.subr.mxu0 0.0
    %196 = vmatpush1.msra.mxu0 %v166
    %197 = vmatprep.subr.mxu0 0.0
    %198 = vmatpush1.msra.mxu0 0.0
    %199 = vmatprep.subr.mxu0 0.0
    %200 = vmatpush1.msra.mxu0 0.0
    %201 = vmatprep.subr.mxu0 0.0
    %202 = vmatpush1.msra.mxu0 0.0
    %203 = vmatprep.subr.mxu0 0.0
    %204 = vmatpush1.msra.mxu0 0.0
    %205 = vmatprep.subr.mxu0 0.0
    %206 = vmatpush1.msra.mxu0 0.0
    %207 = vmatprep.subr.mxu0 0.0
    %208 = vmatpush1.msra.mxu0 0.0
    %209 = vmatprep.subr.mxu0 0.0
    %210 = vmatpush1.msra.mxu0 0.0
    %211 = vmatprep.subr.mxu0 0.0
    %212 = vmatpush1.msra.mxu0 0.0
    %213 = vmatprep.subr.mxu0 0.0
    %214 = vmatpush1.msra.mxu0 0.0
    %215 = vmatprep.subr.mxu0 0.0
    %216 = vmatpush1.msra.mxu0 0.0
    %217 = vmatprep.subr.mxu0 0.0
    %218 = vmatpush1.msra.mxu0 0.0
    %219 = vmatprep.subr.mxu0 0.0
    %220 = vmatpush1.msra.mxu0 0.0
    %221 = vmatprep.subr.mxu0 0.0
    %222 = vmatpush1.msra.mxu0 0.0
    %223 = vmatprep.subr.mxu0 0.0
    %224 = vmatpush1.msra.mxu0 0.0
    %225 = vmatprep.subr.mxu0 0.0
    %226 = vmatpush1.msra.mxu0 0.0
    %227 = vmatprep.subr.mxu0 0.0
    %228 = vmatpush1.msra.mxu0 0.0
    %229 = vmatprep.subr.mxu0 0.0
    %230 = vmatpush1.msra.mxu0 0.0
    %231 = vmatprep.subr.mxu0 0.0
    %232 = vmatpush1.msra.mxu0 0.0
    %233 = vmatprep.subr.mxu0 0.0
    %234 = vmatpush1.msra.mxu0 0.0
    %235 = vmatprep.subr.mxu0 0.0
    %236 = vmatpush1.msra.mxu0 0.0
    %237 = vmatprep.subr.mxu0 0.0
    %238 = vmatpush1.msra.mxu0 0.0
    %239 = vmatprep.subr.mxu0 0.0
    %240 = vmatpush1.msra.mxu0 0.0
    %241 = vmatprep.subr.mxu0 0.0
    %242 = vmatpush1.msra.mxu0 0.0
    %243 = vmatprep.subr.mxu0 0.0
    %244 = vmatpush1.msra.mxu0 0.0
    %245 = vmatprep.mubr.f32.mxu0 0.0
    %246 = vmatmul.mubr.f32.gmra.mrb[0].mxu0 %v176
    %v247 = vpop.f32.mrb[0].mxu0
    %v248 = vadd.f32 %v172, %v247
    %v249 = vpop.f32.mrb[0].mxu0
    %250 = vmatprep.mubr.f32.mxu0 0.0
    %251 = vmatmul.mubr.f32.gmra.mrb[0].mxu0 %v179
    %v252 = vpop.f32.mrb[0].mxu0
    %v253 = vadd.f32 %v172, %v252
    %v254 = vpop.f32.mrb[0].mxu0
    %255 = vdwg.mxu0
    %256 = vst [vmem:[#allocation8] sm:$0xff] %v248
    %257 = vst [vmem:[#allocation8 + $0x8] sm:$0xff] %v253
    // Predicated region
    $region34: #{mae_decoder.1} parent=1 // pred_check
      _
    $region35: #{mae_decoder.1} parent=1 // pred_check_branch
      %259 = sbr.rel (0) target = $region37
    $region36: #{mae_decoder.1} parent=1 // pred_region
      %s261 = ssub.s32 256, 256
      %262 = vsyncadd [#allocation4], %s261
      %s263 = sshll.u32 [#allocation8], 4
      %s264 = int_to_ptr.vmem [resolvable:$true] %s263
      %269 = dma.vmem_to_hbm [thread:$0]  %s264, 256, %s5, [#allocation4], 128, 128, 8
    $region37: #{mae_decoder.1} parent=1 // pred_fallthru
      _
    // Predicated region
    $region38: #{mae_decoder.1} parent=1 // pred_check
      _
    $region39: #{mae_decoder.1} parent=1 // pred_check_branch
      %271 = sbr.rel (0) target = $region41
    $region40: #{mae_decoder.1} parent=1 // pred_region
      %272 = dma.done [#allocation4], 256
    $region41: #{mae_decoder.1} parent=1 // pred_fallthru
      _
    %273 = vsyncpa [#allocation3], 1
    %274 = vsyncpa [#allocation6], 1
    %275 = vsyncpa [#allocation4], 1

</llo_original>
